<compile_context>
chip_gen: v7x
topology: tpu7x:2x2x1
jax: 0.10.0
libtpu: 0.0.40
codegen_flags: <defaults>
</compile_context>

<pallas_src>
import functools

import jax
import jax.numpy as jnp
from jax.experimental import pallas as pl
from jax.experimental.pallas import tpu as pltpu

LANE = 128          # TPU lane width: hidden/feature dims padded to this inside
NEG_BIG = -1e30     # effectively -inf logit for padded output columns


def _round_up(n, m):
    return ((n + m - 1) // m) * m


def mlp_kernel(x_ref, w1_ref, b1_ref, w2_ref, b2_ref,
               w3_ref, b3_ref, w4_ref, b4_ref, o_ref, *, out_f):
    x = x_ref[...]  # f32, fed straight to the MXU

    # Linear(in, 8) + ReLU    (hidden dims padded to 128 lanes, pad cols = 0)
    h = jnp.dot(x, w1_ref[...], preferred_element_type=jnp.float32) + b1_ref[...]
    h = jnp.maximum(h, 0.0)
    # Linear(8, 16) + ReLU
    h = jnp.dot(h, w2_ref[...], preferred_element_type=jnp.float32) + b2_ref[...]
    h = jnp.maximum(h, 0.0)
    # Linear(16, 4) + ReLU
    h = jnp.dot(h, w3_ref[...], preferred_element_type=jnp.float32) + b3_ref[...]
    h = jnp.maximum(h, 0.0)
    # Linear(4, out) -- padded output columns carry bias -1e30 (=> exp -> 0)
    logits = jnp.dot(h, w4_ref[...], preferred_element_type=jnp.float32) + b4_ref[...]

    # Numerically-stable softmax over the lane-dense 128-wide logits.
    # Padded columns contribute exp(-1e30 - m) == 0 to max and sum.
    m = jnp.max(logits, axis=1, keepdims=True)
    e = jnp.exp(logits - m)
    probs = e / jnp.sum(e, axis=1, keepdims=True)   # exact division

    # Store only the real output columns (narrow HBM writeback).
    o_ref[...] = probs[:, :out_f].astype(o_ref.dtype)


def pad_params(params):
    """Pad weights/biases to 128 lanes ONCE (call outside the jitted forward).

    Returns (padded_params_dict, out_f)."""
    out_f = params["w4"].shape[1]
    if out_f > LANE:
        raise ValueError(f"output_size={out_f} > {LANE} not supported by this kernel")
    for name in ("w2", "w3", "w4"):
        if params[name].shape[0] > LANE:
            raise ValueError(f"hidden dim of {name} exceeds {LANE}")

    def pad2(a, rows, cols, cval=0.0):
        return jnp.pad(a, ((0, rows - a.shape[0]), (0, cols - a.shape[1])),
                       constant_values=cval)

    in_f = params["w1"].shape[0]
    padded = {
        "w1": pad2(params["w1"], in_f, LANE),   # [in_f, 128]
        "b1": pad2(params["b1"], 1, LANE),      # [1, 128]
        "w2": pad2(params["w2"], LANE, LANE),   # [128, 128]
        "b2": pad2(params["b2"], 1, LANE),
        "w3": pad2(params["w3"], LANE, LANE),
        "b3": pad2(params["b3"], 1, LANE),
        "w4": pad2(params["w4"], LANE, LANE),
        "b4": pad2(params["b4"], 1, LANE, cval=NEG_BIG),  # pad logits -> -inf
    }
    return padded, out_f


@functools.partial(jax.jit, static_argnames=("out_f", "block_b"))
def neural_net_forward(x, padded_params, *, out_f, block_b=None):
    """x: [B, input_size] float32. padded_params: output of pad_params()."""
    B, in_f = x.shape

    # --- batch tile selection ---------------------------------------------
    #  * small B: one grid step covering the whole (rounded-up) batch
    #  * mid-size B: ~B/2 per tile so grid_n >= 2 (both v7x TensorCores busy)
    #  * large B: 2048-row tiles to amortize per-step pipeline overhead;
    #    VMEM footprint stays a few MiB, under default scoped limits everywhere.
    if block_b is None:
        if B <= 256:
            block_b = max(8, _round_up(B, 8))
        else:
            block_b = min(2048, _round_up(pl.cdiv(B, 2), 8))
    grid_n = pl.cdiv(B, block_b)   # partial last block handled by Pallas

    p = padded_params

    def const_spec(shape):
        # Resident weight/bias tiles: same block for every grid step.
        return pl.BlockSpec(shape, lambda i: (0,) * len(shape))

    in_specs = [
        pl.BlockSpec((block_b, in_f), lambda i: (i, 0)),   # x tiled over batch
        const_spec(p["w1"].shape), const_spec(p["b1"].shape),
        const_spec(p["w2"].shape), const_spec(p["b2"].shape),
        const_spec(p["w3"].shape), const_spec(p["b3"].shape),
        const_spec(p["w4"].shape), const_spec(p["b4"].shape),
    ]
    out_specs = pl.BlockSpec((block_b, out_f), lambda i: (i, 0))

    return pl.pallas_call(
        functools.partial(mlp_kernel, out_f=out_f),
        out_shape=jax.ShapeDtypeStruct((B, out_f), jnp.float32),
        grid=(grid_n,),
        in_specs=in_specs,
        out_specs=out_specs,
        compiler_params=pltpu.CompilerParams(
            dimension_semantics=("parallel",)),
    )(x, p["w1"], p["b1"], p["w2"], p["b2"], p["w3"], p["b3"], p["w4"], p["b4"])


def init_params(key, input_size, output_size):
    """Deterministic init mimicking PyTorch Linear default (U[-1/sqrt(fan_in), +])."""
    dims = [(input_size, 8), (8, 16), (16, 4), (4, output_size)]
    params = {}
    for idx, (fan_in, fan_out) in enumerate(dims, start=1):
        key, kw, kb = jax.random.split(key, 3)
        bound = 1.0 / (fan_in ** 0.5)
        params[f"w{idx}"] = jax.random.uniform(
            kw, (fan_in, fan_out), jnp.float32, -bound, bound)
        params[f"b{idx}"] = jax.random.uniform(
            kb, (1, fan_out), jnp.float32, -bound, bound)
    return params


def reference_forward(x, params):
    h = jnp.maximum(x @ params["w1"] + params["b1"], 0.0)
    h = jnp.maximum(h @ params["w2"] + params["b2"], 0.0)
    h = jnp.maximum(h @ params["w3"] + params["b3"], 0.0)
    logits = h @ params["w4"] + params["b4"]
    return jax.nn.softmax(logits, axis=1)


if __name__ == "__main__":
    input_size = 32
    output_size = 4
    batch = 16

    key = jax.random.PRNGKey(0)
    key, kx = jax.random.split(key)
    x = jax.random.normal(kx, (batch, input_size), dtype=jnp.float32)
    params = init_params(key, input_size, output_size)

    padded_params, out_f = pad_params(params)   # one-time lane padding
    out = neural_net_forward(x, padded_params, out_f=out_f)
    out = jax.block_until_ready(out)

    ref = reference_forward(x, params)
    assert out.shape == (batch, output_size)
    assert jnp.allclose(out, ref, atol=1e-5, rtol=1e-5), "mismatch vs reference"
    assert jnp.allclose(jnp.sum(out, axis=1), 1.0, atol=1e-5), \
        "softmax rows must sum to 1"

    print("KERNEL_OK")
</pallas_src>

<mosaic_0001>
module attributes {stable_mosaic.version = 11 : i64} {
  func.func @mlp_kernel(%arg0: i32, %arg1: memref<16x32xf32, #tpu.memory_space<vmem>>, %arg2: memref<32x128xf32, #tpu.memory_space<vmem>>, %arg3: memref<1x128xf32, #tpu.memory_space<vmem>>, %arg4: memref<128x128xf32, #tpu.memory_space<vmem>>, %arg5: memref<1x128xf32, #tpu.memory_space<vmem>>, %arg6: memref<128x128xf32, #tpu.memory_space<vmem>>, %arg7: memref<1x128xf32, #tpu.memory_space<vmem>>, %arg8: memref<128x128xf32, #tpu.memory_space<vmem>>, %arg9: memref<1x128xf32, #tpu.memory_space<vmem>>, %arg10: memref<16x4xf32, #tpu.memory_space<vmem>>) attributes {dimension_semantics = [#tpu.dimension_semantics<parallel>], iteration_bounds = array<i64: 1>, scalar_prefetch = 0 : i64, scratch_operands = 0 : i64, tpu.core_type = #tpu.core_type<tc>, window_params = [{transform_indices = @transform_0, window_bounds = array<i64: 16, 32>}, {pipeline_mode = #tpu.pipeline_mode<synchronous>, transform_indices = @transform_1, window_bounds = array<i64: 32, 128>}, {pipeline_mode = #tpu.pipeline_mode<synchronous>, transform_indices = @transform_2, window_bounds = array<i64: 1, 128>}, {pipeline_mode = #tpu.pipeline_mode<synchronous>, transform_indices = @transform_3, window_bounds = array<i64: 128, 128>}, {pipeline_mode = #tpu.pipeline_mode<synchronous>, transform_indices = @transform_4, window_bounds = array<i64: 1, 128>}, {pipeline_mode = #tpu.pipeline_mode<synchronous>, transform_indices = @transform_5, window_bounds = array<i64: 128, 128>}, {pipeline_mode = #tpu.pipeline_mode<synchronous>, transform_indices = @transform_6, window_bounds = array<i64: 1, 128>}, {pipeline_mode = #tpu.pipeline_mode<synchronous>, transform_indices = @transform_7, window_bounds = array<i64: 128, 128>}, {pipeline_mode = #tpu.pipeline_mode<synchronous>, transform_indices = @transform_8, window_bounds = array<i64: 1, 128>}, {transform_indices = @transform_9, window_bounds = array<i64: 16, 4>}]} {
    %c0 = arith.constant 0 : index
    %c0_0 = arith.constant 0 : index
    %0 = vector.load %arg1[%c0, %c0_0] : memref<16x32xf32, #tpu.memory_space<vmem>>, vector<16x32xf32>
    %c0_1 = arith.constant 0 : index
    %c0_2 = arith.constant 0 : index
    %1 = vector.load %arg2[%c0_1, %c0_2] : memref<32x128xf32, #tpu.memory_space<vmem>>, vector<32x128xf32>
    %cst = arith.constant dense<0.000000e+00> : vector<16x128xf32>
    %2 = tpu.matmul %0, %1, %cst {dimension_numbers = #tpu.dot_dimension_numbers<[1], [0], [0], [1], [0, 0, 1, 1], [], []>} : vector<16x32xf32>, vector<32x128xf32>, vector<16x128xf32> -> vector<16x128xf32>
    %c0_3 = arith.constant 0 : index
    %c0_4 = arith.constant 0 : index
    %3 = vector.load %arg3[%c0_3, %c0_4] : memref<1x128xf32, #tpu.memory_space<vmem>>, vector<1x128xf32>
    %4 = vector.broadcast %3 : vector<1x128xf32> to vector<16x128xf32>
    %5 = arith.addf %2, %4 : vector<16x128xf32>
    %cst_5 = arith.constant 0.000000e+00 : f32
    %6 = vector.broadcast %cst_5 : f32 to vector<16x128xf32>
    %7 = arith.maximumf %5, %6 : vector<16x128xf32>
    %c0_6 = arith.constant 0 : index
    %c0_7 = arith.constant 0 : index
    %8 = vector.load %arg4[%c0_6, %c0_7] : memref<128x128xf32, #tpu.memory_space<vmem>>, vector<128x128xf32>
    %cst_8 = arith.constant dense<0.000000e+00> : vector<16x128xf32>
    %9 = tpu.matmul %7, %8, %cst_8 {dimension_numbers = #tpu.dot_dimension_numbers<[1], [0], [0], [1], [0, 0, 1, 1], [], []>} : vector<16x128xf32>, vector<128x128xf32>, vector<16x128xf32> -> vector<16x128xf32>
    %c0_9 = arith.constant 0 : index
    %c0_10 = arith.constant 0 : index
    %10 = vector.load %arg5[%c0_9, %c0_10] : memref<1x128xf32, #tpu.memory_space<vmem>>, vector<1x128xf32>
    %11 = vector.broadcast %10 : vector<1x128xf32> to vector<16x128xf32>
    %12 = arith.addf %9, %11 : vector<16x128xf32>
    %cst_11 = arith.constant 0.000000e+00 : f32
    %13 = vector.broadcast %cst_11 : f32 to vector<16x128xf32>
    %14 = arith.maximumf %12, %13 : vector<16x128xf32>
    %c0_12 = arith.constant 0 : index
    %c0_13 = arith.constant 0 : index
    %15 = vector.load %arg6[%c0_12, %c0_13] : memref<128x128xf32, #tpu.memory_space<vmem>>, vector<128x128xf32>
    %cst_14 = arith.constant dense<0.000000e+00> : vector<16x128xf32>
    %16 = tpu.matmul %14, %15, %cst_14 {dimension_numbers = #tpu.dot_dimension_numbers<[1], [0], [0], [1], [0, 0, 1, 1], [], []>} : vector<16x128xf32>, vector<128x128xf32>, vector<16x128xf32> -> vector<16x128xf32>
    %c0_15 = arith.constant 0 : index
    %c0_16 = arith.constant 0 : index
    %17 = vector.load %arg7[%c0_15, %c0_16] : memref<1x128xf32, #tpu.memory_space<vmem>>, vector<1x128xf32>
    %18 = vector.broadcast %17 : vector<1x128xf32> to vector<16x128xf32>
    %19 = arith.addf %16, %18 : vector<16x128xf32>
    %cst_17 = arith.constant 0.000000e+00 : f32
    %20 = vector.broadcast %cst_17 : f32 to vector<16x128xf32>
    %21 = arith.maximumf %19, %20 : vector<16x128xf32>
    %c0_18 = arith.constant 0 : index
    %c0_19 = arith.constant 0 : index
    %22 = vector.load %arg8[%c0_18, %c0_19] : memref<128x128xf32, #tpu.memory_space<vmem>>, vector<128x128xf32>
    %cst_20 = arith.constant dense<0.000000e+00> : vector<16x128xf32>
    %23 = tpu.matmul %21, %22, %cst_20 {dimension_numbers = #tpu.dot_dimension_numbers<[1], [0], [0], [1], [0, 0, 1, 1], [], []>} : vector<16x128xf32>, vector<128x128xf32>, vector<16x128xf32> -> vector<16x128xf32>
    %c0_21 = arith.constant 0 : index
    %c0_22 = arith.constant 0 : index
    %24 = vector.load %arg9[%c0_21, %c0_22] : memref<1x128xf32, #tpu.memory_space<vmem>>, vector<1x128xf32>
    %25 = vector.broadcast %24 : vector<1x128xf32> to vector<16x128xf32>
    %26 = arith.addf %23, %25 : vector<16x128xf32>
    %cst_23 = arith.constant dense<0xFF800000> : vector<16xf32>
    %27 = vector.multi_reduction <maximumf>, %26, %cst_23 [1] : vector<16x128xf32> to vector<16xf32>
    %28 = vector.shape_cast %27 : vector<16xf32> to vector<16x1xf32>
    %29 = vector.broadcast %28 : vector<16x1xf32> to vector<16x128xf32>
    %30 = arith.subf %26, %29 : vector<16x128xf32>
    %31 = math.exp %30 : vector<16x128xf32>
    %cst_24 = arith.constant dense<0.000000e+00> : vector<16xf32>
    %32 = vector.multi_reduction <add>, %31, %cst_24 [1] : vector<16x128xf32> to vector<16xf32>
    %33 = vector.shape_cast %32 : vector<16xf32> to vector<16x1xf32>
    %34 = vector.broadcast %33 : vector<16x1xf32> to vector<16x128xf32>
    %35 = arith.divf %31, %34 : vector<16x128xf32>
    %36 = vector.extract_strided_slice %35 {offsets = [0, 0], sizes = [16, 4], strides = [1, 1]} : vector<16x128xf32> to vector<16x4xf32>
    %c0_25 = arith.constant 0 : index
    %c0_26 = arith.constant 0 : index
    %37 = vector.load %arg10[%c0_25, %c0_26] : memref<16x4xf32, #tpu.memory_space<vmem>>, vector<16x4xf32>
    tpu.vector_store %arg10[%c0_25, %c0_26], %36 {strides = array<i32>} : memref<16x4xf32, #tpu.memory_space<vmem>>, vector<16x4xf32>,
    return
  }
  func.func @transform_0(%arg0: i32) -> (i32, i32) {
    %c0_i32 = arith.constant 0 : i32
    %c0_i32_0 = arith.constant 0 : i32
    return %arg0, %c0_i32 : i32, i32
  }
  func.func @transform_1(%arg0: i32) -> (i32, i32) {
    %c0_i32 = arith.constant 0 : i32
    %c0_i32_0 = arith.constant 0 : i32
    %c0_i32_1 = arith.constant 0 : i32
    return %c0_i32, %c0_i32_0 : i32, i32
  }
  func.func @transform_2(%arg0: i32) -> (i32, i32) {
    %c0_i32 = arith.constant 0 : i32
    %c0_i32_0 = arith.constant 0 : i32
    %c0_i32_1 = arith.constant 0 : i32
    return %c0_i32, %c0_i32_0 : i32, i32
  }
  func.func @transform_3(%arg0: i32) -> (i32, i32) {
    %c0_i32 = arith.constant 0 : i32
    %c0_i32_0 = arith.constant 0 : i32
    %c0_i32_1 = arith.constant 0 : i32
    return %c0_i32, %c0_i32_0 : i32, i32
  }
  func.func @transform_4(%arg0: i32) -> (i32, i32) {
    %c0_i32 = arith.constant 0 : i32
    %c0_i32_0 = arith.constant 0 : i32
    %c0_i32_1 = arith.constant 0 : i32
    return %c0_i32, %c0_i32_0 : i32, i32
  }
  func.func @transform_5(%arg0: i32) -> (i32, i32) {
    %c0_i32 = arith.constant 0 : i32
    %c0_i32_0 = arith.constant 0 : i32
    %c0_i32_1 = arith.constant 0 : i32
    return %c0_i32, %c0_i32_0 : i32, i32
  }
  func.func @transform_6(%arg0: i32) -> (i32, i32) {
    %c0_i32 = arith.constant 0 : i32
    %c0_i32_0 = arith.constant 0 : i32
    %c0_i32_1 = arith.constant 0 : i32
    return %c0_i32, %c0_i32_0 : i32, i32
  }
  func.func @transform_7(%arg0: i32) -> (i32, i32) {
    %c0_i32 = arith.constant 0 : i32
    %c0_i32_0 = arith.constant 0 : i32
    %c0_i32_1 = arith.constant 0 : i32
    return %c0_i32, %c0_i32_0 : i32, i32
  }
  func.func @transform_8(%arg0: i32) -> (i32, i32) {
    %c0_i32 = arith.constant 0 : i32
    %c0_i32_0 = arith.constant 0 : i32
    %c0_i32_1 = arith.constant 0 : i32
    return %c0_i32, %c0_i32_0 : i32, i32
  }
  func.func @transform_9(%arg0: i32) -> (i32, i32) {
    %c0_i32 = arith.constant 0 : i32
    %c0_i32_0 = arith.constant 0 : i32
    return %arg0, %c0_i32 : i32, i32
  }
}

</mosaic_0001>

<llo_original>
// kernel: neural_net_forward.1
$region0: #{neural_net_forward.1}
  #allocation0 [shape = 'u32[]', space=smem, size = 0x4, offset = 0x4, fixed_abs, tag = 'smem constant byte address 0x4 - core index']
  #allocation1 [shape = 'u32[144,128]{1,0:T(1,128)}', space=vmem, size = 0x12000, scoped, tag = 'internal scratch']
  %s0 = inlined_call_operand.hbm [shape: f32[16,32], index: 0, kind: input, shape index: {}]
  %s1 = inlined_call_operand.hbm [shape: f32[32,128], index: 1, kind: input, shape index: {}]
  %s2 = inlined_call_operand.vmem [shape: f32[1,128], index: 2, kind: input, shape index: {}]
  %s3 = inlined_call_operand.hbm [shape: f32[128,128], index: 3, kind: input, shape index: {}]
  %s4 = inlined_call_operand.vmem [shape: f32[1,128], index: 4, kind: input, shape index: {}]
  %s5 = inlined_call_operand.hbm [shape: f32[128,128], index: 5, kind: input, shape index: {}]
  %s6 = inlined_call_operand.vmem [shape: f32[1,128], index: 6, kind: input, shape index: {}]
  %s7 = inlined_call_operand.hbm [shape: f32[128,128], index: 7, kind: input, shape index: {}]
  %s8 = inlined_call_operand.vmem [shape: f32[1,128], index: 8, kind: input, shape index: {}]
  %s9 = inlined_call_operand.vmem [shape: f32[16,4], index: 9, kind: output, shape index: {}]
  %s10 = sld [smem:[#allocation0]]
  $region66: #{neural_net_forward.1} parent=0
    _
  %s12 = ssub.s32 1, %s10
  %s13 = scalar_select 0, %s12, %s10
  $region1: #{neural_net_forward.1} parent=0
    #allocation2 [shape = 'u8[8192]{0}', space=vmem, size = 0x2000, scoped, tag = 'input window, operand 0, single buffered']
    #allocation3 [shape = 's32[1]{0}', space=sflag, size = 0x4, scoped, tag = 'scoped memory for neural_net_forward.1']
    #allocation4 [shape = 'u8[16384]{0}', space=vmem, size = 0x4000, scoped, tag = 'input window, operand 1, single buffered']
    #allocation5 [shape = 's32[1]{0}', space=sflag, size = 0x4, scoped, tag = 'scoped memory for neural_net_forward.1']
    #allocation6 [shape = 'u8[65536]{0}', space=vmem, size = 0x10000, scoped, tag = 'input window, operand 3, single buffered']
    #allocation7 [shape = 'u8[65536]{0}', space=vmem, size = 0x10000, scoped, tag = 'input window, operand 5, single buffered']
    #allocation8 [shape = 's32[1]{0}', space=sflag, size = 0x4, scoped, tag = 'scoped memory for neural_net_forward.1']
    #allocation9 [shape = 'u8[65536]{0}', space=vmem, size = 0x10000, scoped, tag = 'input window, operand 7, single buffered']
    %14 = vsyncpa [#allocation3], 0
    %15 = vsyncpa [#allocation5], 0
    %16 = vsyncpa [#allocation8], 0
    // Predicated region
    $region2: #{neural_net_forward.1} parent=1 // pred_check
      _
    $region3: #{neural_net_forward.1} parent=1 // pred_check_branch
      %18 = sbr.rel (0) target = $region5
    $region4: #{neural_net_forward.1} parent=1 // pred_region
      %s20 = ssub.s32 256, 256
      %21 = vsyncadd [#allocation3], %s20
      %s22 = sshll.u32 [#allocation2], 4
      %s23 = int_to_ptr.vmem [resolvable:$true] %s22
      %28 = dma.hbm_to_vmem [thread:$0]  %s0, 256, %s23, [#allocation3], 128, 128, 8
    $region5: #{neural_net_forward.1} parent=1 // pred_fallthru
      _
    // Predicated region
    $region6: #{neural_net_forward.1} parent=1 // pred_check
      _
    $region7: #{neural_net_forward.1} parent=1 // pred_check_branch
      %30 = sbr.rel (0) target = $region9
    $region8: #{neural_net_forward.1} parent=1 // pred_region
      %s32 = ssub.s32 512, 512
      %33 = vsyncadd [#allocation5], %s32
      %s34 = sshll.u32 [#allocation4], 4
      %s35 = int_to_ptr.vmem [resolvable:$true] %s34
      %40 = dma.hbm_to_vmem [thread:$0]  %s1, 512, %s35, [#allocation5], 128, 128, 8
    $region9: #{neural_net_forward.1} parent=1 // pred_fallthru
      _
    // Predicated region
    $region10: #{neural_net_forward.1} parent=1 // pred_check
      _
    $region11: #{neural_net_forward.1} parent=1 // pred_check_branch
      %42 = sbr.rel (0) target = $region13
    $region12: #{neural_net_forward.1} parent=1 // pred_region
      _
    $region13: #{neural_net_forward.1} parent=1 // pred_fallthru
      _
    // Predicated region
    $region14: #{neural_net_forward.1} parent=1 // pred_check
      _
    $region15: #{neural_net_forward.1} parent=1 // pred_check_branch
      %44 = sbr.rel (0) target = $region17
    $region16: #{neural_net_forward.1} parent=1 // pred_region
      %s46 = ssub.s32 2048, 2048
      %47 = vsyncadd [#allocation5], %s46
      %s48 = sshll.u32 [#allocation6], 4
      %s49 = int_to_ptr.vmem [resolvable:$true] %s48
      %54 = dma.hbm_to_vmem [thread:$0]  %s3, 2048, %s49, [#allocation5], 128, 128, 8
    $region17: #{neural_net_forward.1} parent=1 // pred_fallthru
      _
    // Predicated region
    $region18: #{neural_net_forward.1} parent=1 // pred_check
      _
    $region19: #{neural_net_forward.1} parent=1 // pred_check_branch
      %56 = sbr.rel (0) target = $region21
    $region20: #{neural_net_forward.1} parent=1 // pred_region
      _
    $region21: #{neural_net_forward.1} parent=1 // pred_fallthru
      _
    // Predicated region
    $region22: #{neural_net_forward.1} parent=1 // pred_check
      _
    $region23: #{neural_net_forward.1} parent=1 // pred_check_branch
      %58 = sbr.rel (0) target = $region25
    $region24: #{neural_net_forward.1} parent=1 // pred_region
      %s60 = ssub.s32 2048, 2048
      %61 = vsyncadd [#allocation8], %s60
      %s62 = sshll.u32 [#allocation7], 4
      %s63 = int_to_ptr.vmem [resolvable:$true] %s62
      %68 = dma.hbm_to_vmem [thread:$0]  %s5, 2048, %s63, [#allocation8], 128, 128, 8
    $region25: #{neural_net_forward.1} parent=1 // pred_fallthru
      _
    // Predicated region
    $region26: #{neural_net_forward.1} parent=1 // pred_check
      _
    $region27: #{neural_net_forward.1} parent=1 // pred_check_branch
      %70 = sbr.rel (0) target = $region29
    $region28: #{neural_net_forward.1} parent=1 // pred_region
      _
    $region29: #{neural_net_forward.1} parent=1 // pred_fallthru
      _
    // Predicated region
    $region30: #{neural_net_forward.1} parent=1 // pred_check
      _
    $region31: #{neural_net_forward.1} parent=1 // pred_check_branch
      %72 = sbr.rel (0) target = $region33
    $region32: #{neural_net_forward.1} parent=1 // pred_region
      %s74 = ssub.s32 2048, 2048
      %75 = vsyncadd [#allocation8], %s74
      %s76 = sshll.u32 [#allocation9], 4
      %s77 = int_to_ptr.vmem [resolvable:$true] %s76
      %82 = dma.hbm_to_vmem [thread:$0]  %s7, 2048, %s77, [#allocation8], 128, 128, 8
    $region33: #{neural_net_forward.1} parent=1 // pred_fallthru
      _
    // Predicated region
    $region34: #{neural_net_forward.1} parent=1 // pred_check
      _
    $region35: #{neural_net_forward.1} parent=1 // pred_check_branch
      %84 = sbr.rel (0) target = $region37
    $region36: #{neural_net_forward.1} parent=1 // pred_region
      _
    $region37: #{neural_net_forward.1} parent=1 // pred_fallthru
      _
    // Predicated region
    $region38: #{neural_net_forward.1} parent=1 // pred_check
      _
    $region39: #{neural_net_forward.1} parent=1 // pred_check_branch
      %86 = sbr.rel (0) target = $region41
    $region40: #{neural_net_forward.1} parent=1 // pred_region
      %87 = dma.done [#allocation3], 256
    $region41: #{neural_net_forward.1} parent=1 // pred_fallthru
      _
    // Predicated region
    $region42: #{neural_net_forward.1} parent=1 // pred_check
      _
    $region43: #{neural_net_forward.1} parent=1 // pred_check_branch
      %89 = sbr.rel (0) target = $region45
    $region44: #{neural_net_forward.1} parent=1 // pred_region
      %90 = dma.done [#allocation5], 512
    $region45: #{neural_net_forward.1} parent=1 // pred_fallthru
      _
    // Predicated region
    $region46: #{neural_net_forward.1} parent=1 // pred_check
      _
    $region47: #{neural_net_forward.1} parent=1 // pred_check_branch
      %92 = sbr.rel (0) target = $region49
    $region48: #{neural_net_forward.1} parent=1 // pred_region
      %93 = dma.done [#allocation5], 2048
    $region49: #{neural_net_forward.1} parent=1 // pred_fallthru
      _
    // Predicated region
    $region50: #{neural_net_forward.1} parent=1 // pred_check
      _
    $region51: #{neural_net_forward.1} parent=1 // pred_check_branch
      %95 = sbr.rel (0) target = $region53
    $region52: #{neural_net_forward.1} parent=1 // pred_region
      %96 = dma.done [#allocation8], 2048
    $region53: #{neural_net_forward.1} parent=1 // pred_fallthru
      _
    // Predicated region
    $region54: #{neural_net_forward.1} parent=1 // pred_check
      _
    $region55: #{neural_net_forward.1} parent=1 // pred_check_branch
      %98 = sbr.rel (0) target = $region57
    $region56: #{neural_net_forward.1} parent=1 // pred_region
      %99 = dma.done [#allocation8], 2048
    $region57: #{neural_net_forward.1} parent=1 // pred_fallthru
      _
    %v100 = vld [vmem:[#allocation2] sm:$0xff]
    %v101 = vld [vmem:[#allocation2 + $0x8] sm:$0xff]
    %v102 = vld [vmem:[#allocation4] sm:$0xff]
    %v103 = vld [vmem:[#allocation4 + $0x8] sm:$0xff]
    %v104 = vld [vmem:[#allocation4 + $0x10] sm:$0xff]
    %v105 = vld [vmem:[#allocation4 + $0x18] sm:$0xff]
    %v106 = vld [vmem:[%s2] sm:$0x1]
    %v108 = vlaneseq
    %v109 = vshrl.u32 %v108, 7
    %v110 = vsub.s32 0, %v109
    %v111 = vrot.slane %v106, %v110
    %vm113 = vcmask 261120
    %v115 = vsel %vm113, %v100, 0
    %v118 = vsel %vm113, %v101, 0
    %120 = vmatprep.subr.mxu0 0.0
    %121 = vmatpush1.msra.mxu0 %v102
    %122 = vmatprep.subr.mxu0 0.0
    %123 = vmatpush1.msra.mxu0 %v103
    %124 = vmatprep.subr.mxu0 0.0
    %125 = vmatpush1.msra.mxu0 %v104
    %126 = vmatprep.subr.mxu0 0.0
    %127 = vmatpush1.msra.mxu0 %v105
    %128 = vmatprep.subr.mxu0 0.0
    %129 = vmatpush1.msra.mxu0 0.0
    %130 = vmatprep.subr.mxu0 0.0
    %131 = vmatpush1.msra.mxu0 0.0
    %132 = vmatprep.subr.mxu0 0.0
    %133 = vmatpush1.msra.mxu0 0.0
    %134 = vmatprep.subr.mxu0 0.0
    %135 = vmatpush1.msra.mxu0 0.0
    %136 = vmatprep.subr.mxu0 0.0
    %137 = vmatpush1.msra.mxu0 0.0
    %138 = vmatprep.subr.mxu0 0.0
    %139 = vmatpush1.msra.mxu0 0.0
    %140 = vmatprep.subr.mxu0 0.0
    %141 = vmatpush1.msra.mxu0 0.0
    %142 = vmatprep.subr.mxu0 0.0
    %143 = vmatpush1.msra.mxu0 0.0
    %144 = vmatprep.subr.mxu0 0.0
    %145 = vmatpush1.msra.mxu0 0.0
    %146 = vmatprep.subr.mxu0 0.0
    %147 = vmatpush1.msra.mxu0 0.0
    %148 = vmatprep.subr.mxu0 0.0
    %149 = vmatpush1.msra.mxu0 0.0
    %150 = vmatprep.subr.mxu0 0.0
    %151 = vmatpush1.msra.mxu0 0.0
    %152 = vmatprep.subr.mxu0 0.0
    %153 = vmatpush1.msra.mxu0 0.0
    %154 = vmatprep.subr.mxu0 0.0
    %155 = vmatpush1.msra.mxu0 0.0
    %156 = vmatprep.subr.mxu0 0.0
    %157 = vmatpush1.msra.mxu0 0.0
    %158 = vmatprep.subr.mxu0 0.0
    %159 = vmatpush1.msra.mxu0 0.0
    %160 = vmatprep.subr.mxu0 0.0
    %161 = vmatpush1.msra.mxu0 0.0
    %162 = vmatprep.subr.mxu0 0.0
    %163 = vmatpush1.msra.mxu0 0.0
    %164 = vmatprep.subr.mxu0 0.0
    %165 = vmatpush1.msra.mxu0 0.0
    %166 = vmatprep.subr.mxu0 0.0
    %167 = vmatpush1.msra.mxu0 0.0
    %168 = vmatprep.subr.mxu0 0.0
    %169 = vmatpush1.msra.mxu0 0.0
    %170 = vmatprep.subr.mxu0 0.0
    %171 = vmatpush1.msra.mxu0 0.0
    %172 = vmatprep.subr.mxu0 0.0
    %173 = vmatpush1.msra.mxu0 0.0
    %174 = vmatprep.subr.mxu0 0.0
    %175 = vmatpush1.msra.mxu0 0.0
    %176 = vmatprep.subr.mxu0 0.0
    %177 = vmatpush1.msra.mxu0 0.0
    %178 = vmatprep.subr.mxu0 0.0
    %179 = vmatpush1.msra.mxu0 0.0
    %180 = vmatprep.subr.mxu0 0.0
    %181 = vmatpush1.msra.mxu0 0.0
    %182 = vmatprep.subr.mxu0 0.0
    %183 = vmatpush1.msra.mxu0 0.0
    %184 = vmatprep.mubr.f32.mxu0 0.0
    %185 = vmatmul.mubr.f32.gmra.mrb[0].mxu0 %v115
    %v186 = vpop.f32.mrb[0].mxu0
    %v187 = vadd.f32 %v111, %v186
    %v188 = vpop.f32.mrb[0].mxu0
    %189 = vmatprep.mubr.f32.mxu0 0.0
    %190 = vmatmul.mubr.f32.gmra.mrb[0].mxu0 %v118
    %v191 = vpop.f32.mrb[0].mxu0
    %v192 = vadd.f32 %v111, %v191
    %v193 = vpop.f32.mrb[0].mxu0
    %194 = vdwg.mxu0
    %v195 = vmax.f32 %v187, 0.0
    %v196 = vmax.f32 %v192, 0.0
    %v197 = vld [vmem:[#allocation6] sm:$0xff]
    %v198 = vld [vmem:[#allocation6 + $0x8] sm:$0xff]
    %v199 = vld [vmem:[#allocation6 + $0x10] sm:$0xff]
    %v200 = vld [vmem:[#allocation6 + $0x18] sm:$0xff]
    %v201 = vld [vmem:[#allocation6 + $0x20] sm:$0xff]
    %v202 = vld [vmem:[#allocation6 + $0x28] sm:$0xff]
    %v203 = vld [vmem:[#allocation6 + $0x30] sm:$0xff]
    %v204 = vld [vmem:[#allocation6 + $0x38] sm:$0xff]
    %v205 = vld [vmem:[#allocation6 + $0x40] sm:$0xff]
    %v206 = vld [vmem:[#allocation6 + $0x48] sm:$0xff]
    %v207 = vld [vmem:[#allocation6 + $0x50] sm:$0xff]
    %v208 = vld [vmem:[#allocation6 + $0x58] sm:$0xff]
    %v209 = vld [vmem:[#allocation6 + $0x60] sm:$0xff]
    %v210 = vld [vmem:[#allocation6 + $0x68] sm:$0xff]
    %v211 = vld [vmem:[#allocation6 + $0x70] sm:$0xff]
    %v212 = vld [vmem:[#allocation6 + $0x78] sm:$0xff]
    %v213 = vld [vmem:[%s4] sm:$0x1]
    %v215 = vlaneseq
    %v216 = vshrl.u32 %v215, 7
    %v217 = vsub.s32 0, %v216
    %v218 = vrot.slane %v213, %v217
    %220 = vmatprep.subr.mxu0 0.0
    %221 = vmatpush1.msra.mxu0 %v197
    %222 = vmatprep.subr.mxu0 0.0
    %223 = vmatpush1.msra.mxu0 %v198
    %224 = vmatprep.subr.mxu0 0.0
    %225 = vmatpush1.msra.mxu0 %v199
    %226 = vmatprep.subr.mxu0 0.0
    %227 = vmatpush1.msra.mxu0 %v200
    %228 = vmatprep.subr.mxu0 0.0
    %229 = vmatpush1.msra.mxu0 %v201
    %230 = vmatprep.subr.mxu0 0.0
    %231 = vmatpush1.msra.mxu0 %v202
    %232 = vmatprep.subr.mxu0 0.0
    %233 = vmatpush1.msra.mxu0 %v203
    %234 = vmatprep.subr.mxu0 0.0
    %235 = vmatpush1.msra.mxu0 %v204
    %236 = vmatprep.subr.mxu0 0.0
    %237 = vmatpush1.msra.mxu0 %v205
    %238 = vmatprep.subr.mxu0 0.0
    %239 = vmatpush1.msra.mxu0 %v206
    %240 = vmatprep.subr.mxu0 0.0
    %241 = vmatpush1.msra.mxu0 %v207
    %242 = vmatprep.subr.mxu0 0.0
    %243 = vmatpush1.msra.mxu0 %v208
    %244 = vmatprep.subr.mxu0 0.0
    %245 = vmatpush1.msra.mxu0 %v209
    %246 = vmatprep.subr.mxu0 0.0
    %247 = vmatpush1.msra.mxu0 %v210
    %248 = vmatprep.subr.mxu0 0.0
    %249 = vmatpush1.msra.mxu0 %v211
    %250 = vmatprep.subr.mxu0 0.0
    %251 = vmatpush1.msra.mxu0 %v212
    %252 = vmatprep.subr.mxu0 0.0
    %253 = vmatpush1.msra.mxu0 0.0
    %254 = vmatprep.subr.mxu0 0.0
    %255 = vmatpush1.msra.mxu0 0.0
    %256 = vmatprep.subr.mxu0 0.0
    %257 = vmatpush1.msra.mxu0 0.0
    %258 = vmatprep.subr.mxu0 0.0
    %259 = vmatpush1.msra.mxu0 0.0
    %260 = vmatprep.subr.mxu0 0.0
    %261 = vmatpush1.msra.mxu0 0.0
    %262 = vmatprep.subr.mxu0 0.0
    %263 = vmatpush1.msra.mxu0 0.0
    %264 = vmatprep.subr.mxu0 0.0
    %265 = vmatpush1.msra.mxu0 0.0
    %266 = vmatprep.subr.mxu0 0.0
    %267 = vmatpush1.msra.mxu0 0.0
    %268 = vmatprep.subr.mxu0 0.0
    %269 = vmatpush1.msra.mxu0 0.0
    %270 = vmatprep.subr.mxu0 0.0
    %271 = vmatpush1.msra.mxu0 0.0
    %272 = vmatprep.subr.mxu0 0.0
    %273 = vmatpush1.msra.mxu0 0.0
    %274 = vmatprep.subr.mxu0 0.0
    %275 = vmatpush1.msra.mxu0 0.0
    %276 = vmatprep.subr.mxu0 0.0
    %277 = vmatpush1.msra.mxu0 0.0
    %278 = vmatprep.subr.mxu0 0.0
    %279 = vmatpush1.msra.mxu0 0.0
    %280 = vmatprep.subr.mxu0 0.0
    %281 = vmatpush1.msra.mxu0 0.0
    %282 = vmatprep.subr.mxu0 0.0
    %283 = vmatpush1.msra.mxu0 0.0
    %284 = vmatprep.mubr.f32.mxu0 0.0
    %285 = vmatmul.mubr.f32.gmra.mrb[0].mxu0 %v195
    %v286 = vpop.f32.mrb[0].mxu0
    %v287 = vadd.f32 %v218, %v286
    %v288 = vpop.f32.mrb[0].mxu0
    %289 = vmatprep.mubr.f32.mxu0 0.0
    %290 = vmatmul.mubr.f32.gmra.mrb[0].mxu0 %v196
    %v291 = vpop.f32.mrb[0].mxu0
    %v292 = vadd.f32 %v218, %v291
    %v293 = vpop.f32.mrb[0].mxu0
    %294 = vdwg.mxu0
    %v295 = vmax.f32 %v287, 0.0
    %v296 = vmax.f32 %v292, 0.0
    %v297 = vld [vmem:[#allocation7] sm:$0xff]
    %v298 = vld [vmem:[#allocation7 + $0x8] sm:$0xff]
    %v299 = vld [vmem:[#allocation7 + $0x10] sm:$0xff]
    %v300 = vld [vmem:[#allocation7 + $0x18] sm:$0xff]
    %v301 = vld [vmem:[#allocation7 + $0x20] sm:$0xff]
    %v302 = vld [vmem:[#allocation7 + $0x28] sm:$0xff]
    %v303 = vld [vmem:[#allocation7 + $0x30] sm:$0xff]
    %v304 = vld [vmem:[#allocation7 + $0x38] sm:$0xff]
    %v305 = vld [vmem:[#allocation7 + $0x40] sm:$0xff]
    %v306 = vld [vmem:[#allocation7 + $0x48] sm:$0xff]
    %v307 = vld [vmem:[#allocation7 + $0x50] sm:$0xff]
    %v308 = vld [vmem:[#allocation7 + $0x58] sm:$0xff]
    %v309 = vld [vmem:[#allocation7 + $0x60] sm:$0xff]
    %v310 = vld [vmem:[#allocation7 + $0x68] sm:$0xff]
    %v311 = vld [vmem:[#allocation7 + $0x70] sm:$0xff]
    %v312 = vld [vmem:[#allocation7 + $0x78] sm:$0xff]
    %v313 = vld [vmem:[%s6] sm:$0x1]
    %v315 = vlaneseq
    %v316 = vshrl.u32 %v315, 7
    %v317 = vsub.s32 0, %v316
    %v318 = vrot.slane %v313, %v317
    %320 = vmatprep.subr.mxu0 0.0
    %321 = vmatpush1.msra.mxu0 %v297
    %322 = vmatprep.subr.mxu0 0.0
    %323 = vmatpush1.msra.mxu0 %v298
    %324 = vmatprep.subr.mxu0 0.0
    %325 = vmatpush1.msra.mxu0 %v299
    %326 = vmatprep.subr.mxu0 0.0
    %327 = vmatpush1.msra.mxu0 %v300
    %328 = vmatprep.subr.mxu0 0.0
    %329 = vmatpush1.msra.mxu0 %v301
    %330 = vmatprep.subr.mxu0 0.0
    %331 = vmatpush1.msra.mxu0 %v302
    %332 = vmatprep.subr.mxu0 0.0
    %333 = vmatpush1.msra.mxu0 %v303
    %334 = vmatprep.subr.mxu0 0.0
    %335 = vmatpush1.msra.mxu0 %v304
    %336 = vmatprep.subr.mxu0 0.0
    %337 = vmatpush1.msra.mxu0 %v305
    %338 = vmatprep.subr.mxu0 0.0
    %339 = vmatpush1.msra.mxu0 %v306
    %340 = vmatprep.subr.mxu0 0.0
    %341 = vmatpush1.msra.mxu0 %v307
    %342 = vmatprep.subr.mxu0 0.0
    %343 = vmatpush1.msra.mxu0 %v308
    %344 = vmatprep.subr.mxu0 0.0
    %345 = vmatpush1.msra.mxu0 %v309
    %346 = vmatprep.subr.mxu0 0.0
    %347 = vmatpush1.msra.mxu0 %v310
    %348 = vmatprep.subr.mxu0 0.0
    %349 = vmatpush1.msra.mxu0 %v311
    %350 = vmatprep.subr.mxu0 0.0
    %351 = vmatpush1.msra.mxu0 %v312
    %352 = vmatprep.subr.mxu0 0.0
    %353 = vmatpush1.msra.mxu0 0.0
    %354 = vmatprep.subr.mxu0 0.0
    %355 = vmatpush1.msra.mxu0 0.0
    %356 = vmatprep.subr.mxu0 0.0
    %357 = vmatpush1.msra.mxu0 0.0
    %358 = vmatprep.subr.mxu0 0.0
    %359 = vmatpush1.msra.mxu0 0.0
    %360 = vmatprep.subr.mxu0 0.0
    %361 = vmatpush1.msra.mxu0 0.0
    %362 = vmatprep.subr.mxu0 0.0
    %363 = vmatpush1.msra.mxu0 0.0
    %364 = vmatprep.subr.mxu0 0.0
    %365 = vmatpush1.msra.mxu0 0.0
    %366 = vmatprep.subr.mxu0 0.0
    %367 = vmatpush1.msra.mxu0 0.0
    %368 = vmatprep.subr.mxu0 0.0
    %369 = vmatpush1.msra.mxu0 0.0
    %370 = vmatprep.subr.mxu0 0.0
    %371 = vmatpush1.msra.mxu0 0.0
    %372 = vmatprep.subr.mxu0 0.0
    %373 = vmatpush1.msra.mxu0 0.0
    %374 = vmatprep.subr.mxu0 0.0
    %375 = vmatpush1.msra.mxu0 0.0
    %376 = vmatprep.subr.mxu0 0.0
    %377 = vmatpush1.msra.mxu0 0.0
    %378 = vmatprep.subr.mxu0 0.0
    %379 = vmatpush1.msra.mxu0 0.0
    %380 = vmatprep.subr.mxu0 0.0
    %381 = vmatpush1.msra.mxu0 0.0
    %382 = vmatprep.subr.mxu0 0.0
    %383 = vmatpush1.msra.mxu0 0.0
    %384 = vmatprep.mubr.f32.mxu0 0.0
    %385 = vmatmul.mubr.f32.gmra.mrb[0].mxu0 %v295
    %v386 = vpop.f32.mrb[0].mxu0
    %v387 = vadd.f32 %v318, %v386
    %v388 = vpop.f32.mrb[0].mxu0
    %389 = vmatprep.mubr.f32.mxu0 0.0
    %390 = vmatmul.mubr.f32.gmra.mrb[0].mxu0 %v296
    %v391 = vpop.f32.mrb[0].mxu0
    %v392 = vadd.f32 %v318, %v391
    %v393 = vpop.f32.mrb[0].mxu0
    %394 = vdwg.mxu0
    %v395 = vmax.f32 %v387, 0.0
    %v396 = vmax.f32 %v392, 0.0
    %v397 = vld [vmem:[#allocation9] sm:$0xff]
    %v398 = vld [vmem:[#allocation9 + $0x8] sm:$0xff]
    %v399 = vld [vmem:[#allocation9 + $0x10] sm:$0xff]
    %v400 = vld [vmem:[#allocation9 + $0x18] sm:$0xff]
    %v401 = vld [vmem:[#allocation9 + $0x20] sm:$0xff]
    %v402 = vld [vmem:[#allocation9 + $0x28] sm:$0xff]
    %v403 = vld [vmem:[#allocation9 + $0x30] sm:$0xff]
    %v404 = vld [vmem:[#allocation9 + $0x38] sm:$0xff]
    %v405 = vld [vmem:[#allocation9 + $0x40] sm:$0xff]
    %v406 = vld [vmem:[#allocation9 + $0x48] sm:$0xff]
    %v407 = vld [vmem:[#allocation9 + $0x50] sm:$0xff]
    %v408 = vld [vmem:[#allocation9 + $0x58] sm:$0xff]
    %v409 = vld [vmem:[#allocation9 + $0x60] sm:$0xff]
    %v410 = vld [vmem:[#allocation9 + $0x68] sm:$0xff]
    %v411 = vld [vmem:[#allocation9 + $0x70] sm:$0xff]
    %v412 = vld [vmem:[#allocation9 + $0x78] sm:$0xff]
    %v413 = vld [vmem:[%s8] sm:$0x1]
    %v415 = vlaneseq
    %v416 = vshrl.u32 %v415, 7
    %v417 = vsub.s32 0, %v416
    %v418 = vrot.slane %v413, %v417
    %420 = vmatprep.subr.mxu0 0.0
    %421 = vmatpush1.msra.mxu0 %v397
    %422 = vmatprep.subr.mxu0 0.0
    %423 = vmatpush1.msra.mxu0 %v398
    %424 = vmatprep.subr.mxu0 0.0
    %425 = vmatpush1.msra.mxu0 %v399
    %426 = vmatprep.subr.mxu0 0.0
    %427 = vmatpush1.msra.mxu0 %v400
    %428 = vmatprep.subr.mxu0 0.0
    %429 = vmatpush1.msra.mxu0 %v401
    %430 = vmatprep.subr.mxu0 0.0
    %431 = vmatpush1.msra.mxu0 %v402
    %432 = vmatprep.subr.mxu0 0.0
    %433 = vmatpush1.msra.mxu0 %v403
    %434 = vmatprep.subr.mxu0 0.0
    %435 = vmatpush1.msra.mxu0 %v404
    %436 = vmatprep.subr.mxu0 0.0
    %437 = vmatpush1.msra.mxu0 %v405
    %438 = vmatprep.subr.mxu0 0.0
    %439 = vmatpush1.msra.mxu0 %v406
    %440 = vmatprep.subr.mxu0 0.0
    %441 = vmatpush1.msra.mxu0 %v407
    %442 = vmatprep.subr.mxu0 0.0
    %443 = vmatpush1.msra.mxu0 %v408
    %444 = vmatprep.subr.mxu0 0.0
    %445 = vmatpush1.msra.mxu0 %v409
    %446 = vmatprep.subr.mxu0 0.0
    %447 = vmatpush1.msra.mxu0 %v410
    %448 = vmatprep.subr.mxu0 0.0
    %449 = vmatpush1.msra.mxu0 %v411
    %450 = vmatprep.subr.mxu0 0.0
    %451 = vmatpush1.msra.mxu0 %v412
    %452 = vmatprep.subr.mxu0 0.0
    %453 = vmatpush1.msra.mxu0 0.0
    %454 = vmatprep.subr.mxu0 0.0
    %455 = vmatpush1.msra.mxu0 0.0
    %456 = vmatprep.subr.mxu0 0.0
    %457 = vmatpush1.msra.mxu0 0.0
    %458 = vmatprep.subr.mxu0 0.0
    %459 = vmatpush1.msra.mxu0 0.0
    %460 = vmatprep.subr.mxu0 0.0
    %461 = vmatpush1.msra.mxu0 0.0
    %462 = vmatprep.subr.mxu0 0.0
    %463 = vmatpush1.msra.mxu0 0.0
    %464 = vmatprep.subr.mxu0 0.0
    %465 = vmatpush1.msra.mxu0 0.0
    %466 = vmatprep.subr.mxu0 0.0
    %467 = vmatpush1.msra.mxu0 0.0
    %468 = vmatprep.subr.mxu0 0.0
    %469 = vmatpush1.msra.mxu0 0.0
    %470 = vmatprep.subr.mxu0 0.0
    %471 = vmatpush1.msra.mxu0 0.0
    %472 = vmatprep.subr.mxu0 0.0
    %473 = vmatpush1.msra.mxu0 0.0
    %474 = vmatprep.subr.mxu0 0.0
    %475 = vmatpush1.msra.mxu0 0.0
    %476 = vmatprep.subr.mxu0 0.0
    %477 = vmatpush1.msra.mxu0 0.0
    %478 = vmatprep.subr.mxu0 0.0
    %479 = vmatpush1.msra.mxu0 0.0
    %480 = vmatprep.subr.mxu0 0.0
    %481 = vmatpush1.msra.mxu0 0.0
    %482 = vmatprep.subr.mxu0 0.0
    %483 = vmatpush1.msra.mxu0 0.0
    %484 = vmatprep.mubr.f32.mxu0 0.0
    %485 = vmatmul.mubr.f32.gmra.mrb[0].mxu0 %v395
    %v486 = vpop.f32.mrb[0].mxu0
    %v487 = vadd.f32 %v418, %v486
    %v488 = vpop.f32.mrb[0].mxu0
    %489 = vmatprep.mubr.f32.mxu0 0.0
    %490 = vmatmul.mubr.f32.gmra.mrb[0].mxu0 %v396
    %v491 = vpop.f32.mrb[0].mxu0
    %v492 = vadd.f32 %v418, %v491
    %v493 = vpop.f32.mrb[0].mxu0
    %494 = vdwg.mxu0
    %495 = vmax.xlane.f32.xlu0 %v487
    %v496 = vpop.xlane.xlu0 %495
    %497 = vmax.xlane.f32.xlu0 %v492
    %v498 = vpop.xlane.xlu0 %497
    %v499 = vsub.f32 %v487, %v496
    %v500 = vsub.f32 %v492, %v498
    %v501 = vmul.f32 %v499, 1.442695
    %v502 = vpow.pop %v501
    %v503 = vmul.f32 %v500, 1.442695
    %v504 = vpow.pop %v503
    %505 = vadd.xlane.f32.xlu0 %v502
    %v506 = vpop.xlane.xlu0 %505
    %507 = vadd.xlane.f32.xlu0 %v504
    %v508 = vpop.xlane.xlu0 %507
    %v509 = vrcp.pop %v506
    %v510 = vmul.f32 %v502, %v509
    %v511 = vrcp.pop %v508
    %v512 = vmul.f32 %v504, %v511
    %vm513 = vcmask 31744
    %514 = vst.msk [vmem:[%s9] sm:$0xff] %vm513, %v510
    %515 = vst.msk [vmem:[%s9 + $0x8] sm:$0xff] %vm513, %v512
    // Predicated region
    $region58: #{neural_net_forward.1} parent=1 // pred_check
      _
    $region59: #{neural_net_forward.1} parent=1 // pred_check_branch
      %517 = sbr.rel (0) target = $region61
    $region60: #{neural_net_forward.1} parent=1 // pred_region
      _
    $region61: #{neural_net_forward.1} parent=1 // pred_fallthru
      _
    // Predicated region
    $region62: #{neural_net_forward.1} parent=1 // pred_check
      _
    $region63: #{neural_net_forward.1} parent=1 // pred_check_branch
      %519 = sbr.rel (0) target = $region65
    $region64: #{neural_net_forward.1} parent=1 // pred_region
      _
    $region65: #{neural_net_forward.1} parent=1 // pred_fallthru
      _
    %520 = vsyncpa [#allocation3], 1
    %521 = vsyncpa [#allocation5], 1
    %522 = vsyncpa [#allocation8], 1

</llo_original>
